<compile_context>
chip_gen: v5e
topology: v5e:2x2
jax: 0.10.0
libtpu: 0.0.40
codegen_flags: <defaults>
</compile_context>

<pallas_src>
import jax
import jax.numpy as jnp
import numpy as np
from jax.experimental import pallas as pl
from jax.experimental.pallas import tpu as pltpu

# ----------------------------- model config ---------------------------------
B = 2            # batch
C_IN = 4         # input_channels
L = 16           # sequence_length (even)
K = 3            # conv kernel size
C_OUT = 16       # conv out channels
L2 = L // 2      # after MaxPool1d(2)
CIL = C_IN * L               # 64  (K-dim of the conv matmul)
FLAT = C_OUT * L2            # 128 (flatten size, also pooled width)
NCOL = 2 * FLAT              # 256 (conv columns: parity-major / position / channel)
H1 = 32          # fc1 hidden
EPS = 1e-5


# ----------------------------- fused Pallas kernel ---------------------------
def fused_forward_kernel(x_ref, bw_ref, sp_ref, out_ref):
    """Whole forward pass in one kernel.

    x:     (B, CIL)        raw input, flattened channel-major (= torch .view order)
    bw:    (CIL+FLAT, NCOL) packed weights:
             rows 0:CIL          -> conv-as-matmul weight wg (BN scale folded);
                                    column (s*L2 + p)*C_OUT + c = output pos 2p+s, chan c
             rows CIL: , cols :H1 -> fc1 weight permuted to pooled column order
    sp:    (4, NCOL)       packed small params:
             row 0 -> folded BN/bias shift tiled per conv column
             row 1, cols :H1 -> fc1 bias
             row 2, cols :H1 -> fc2 weight (row vector)
             row 3, col 0     -> fc2 bias
    out:   (B, 1)
    """
    x = x_ref[...]                                   # (B, CIL)
    wg = bw_ref[:CIL, :]                             # (CIL, NCOL)
    w1 = bw_ref[CIL:, :H1]                           # (FLAT, H1)
    shift = sp_ref[0:1, :]                           # (1, NCOL)
    b1 = sp_ref[1:2, :H1]                            # (1, H1)
    w2 = sp_ref[2:3, :H1]                            # (1, H1)
    b2 = sp_ref[3:4, 0:1]                            # (1, 1)

    # Conv1d + BatchNorm1d (running stats) + ReLU for every position: one MXU matmul.
    y = jnp.dot(x, wg, preferred_element_type=jnp.float32)       # (B, NCOL)
    y = jnp.maximum(y + shift, 0.0)

    # MaxPool1d(2): even-position block vs odd-position block (128-aligned lane slices).
    pooled = jnp.maximum(y[:, :FLAT], y[:, FLAT:])               # (B, FLAT)

    # fc1 -> ReLU (dropout: identity at inference).
    z1 = jnp.dot(pooled, w1, preferred_element_type=jnp.float32) + b1   # (B, H1)
    z1 = jnp.maximum(z1, 0.0)

    # fc2 as VPU multiply + XLU lane reduction (avoids a degenerate N=1 MXU matmul).
    z2 = jnp.sum(z1 * w2, axis=-1, keepdims=True) + b2           # (B, 1)

    # Sigmoid (exp on EUP; exact form keeps the 1e-5 check tight).
    out_ref[...] = 1.0 / (1.0 + jnp.exp(-z2))


_VMEM_SPEC = pl.BlockSpec(memory_space=pltpu.MemorySpace.VMEM)

_COST = pl.CostEstimate(
    flops=2 * B * (CIL * NCOL + FLAT * H1) + 2 * B * H1,   # two matmuls + fc2 reduce
    transcendentals=B,                                      # sigmoid exp per row
    bytes_accessed=(B * CIL + (CIL + FLAT) * NCOL + 4 * NCOL + B) * 4,
)


@jax.jit
def cnn_forward(x, prepped):
    """x: (B, C_IN, L) float32, PyTorch NCL layout. prepped: prepare_params output."""
    big_w, small = prepped
    x_flat = x.reshape(B, CIL)             # row-major no-op reshape; single input DMA
    return pl.pallas_call(
        fused_forward_kernel,
        out_shape=jax.ShapeDtypeStruct((B, 1), jnp.float32),
        in_specs=[_VMEM_SPEC, _VMEM_SPEC, _VMEM_SPEC],
        out_specs=_VMEM_SPEC,
        cost_estimate=_COST,
    )(x_flat, big_w, small)


# ----------------------------- parameter folding (once, host side) -----------
def prepare_params(params):
    """Fold conv bias + BN running stats into a block-structured conv matmul weight,
    permute fc1 weights into the kernel's pooled column order, and pack everything
    into two VMEM slabs (big_w, small). Pure function of the parameters; call once,
    outside the per-step forward."""
    (w_conv, b_conv, gamma, beta, rmean, rvar,
     fc1_w, fc1_b, fc2_w, fc2_b) = [np.asarray(p, np.float32) for p in params]

    scale = gamma / np.sqrt(rvar + EPS)                      # (C_OUT,)
    shift_c = (b_conv - rmean) * scale + beta                # (C_OUT,)

    # wf[ci, k, c] = w_conv[c, ci, k] * scale[c]
    wf = (w_conv * scale[:, None, None]).transpose(1, 2, 0)  # (C_IN, K, C_OUT)

    # Giant conv weight: rows index (ci, t) of the flattened input, columns index
    # (s, p, c) = (position parity, pooled position, channel). padding=1.
    wg = np.zeros((CIL, NCOL), np.float32)
    rows_ci = np.arange(C_IN) * L
    for s in range(2):
        for p in range(L2):
            l = 2 * p + s                       # conv output position
            base = (s * L2 + p) * C_OUT
            for k in range(K):
                t = l - 1 + k                   # input position tapped by this k
                if 0 <= t < L:
                    wg[rows_ci + t, base:base + C_OUT] += wf[:, k, :]

    # fc1: PyTorch flat index is c*L2 + p; kernel pooled column index is p*C_OUT + c.
    w1_perm = fc1_w.reshape(H1, C_OUT, L2).transpose(2, 1, 0).reshape(FLAT, H1)

    # Packed weight slab (one DMA instead of two): wg on top, fc1 weight below.
    big_w = np.zeros((CIL + FLAT, NCOL), np.float32)
    big_w[:CIL, :] = wg
    big_w[CIL:, :H1] = w1_perm

    # Packed small-param slab (one DMA instead of four).
    small = np.zeros((4, NCOL), np.float32)
    small[0, :] = np.tile(shift_c, 2 * L2)       # folded BN/bias shift per column
    small[1, :H1] = fc1_b
    small[2, :H1] = fc2_w.reshape(-1)            # fc2 weight as a row vector
    small[3, 0] = fc2_b[0]

    return jnp.asarray(big_w), jnp.asarray(small)


# ----------------------------- reference (pure JAX) ---------------------------
def reference_forward(x, params):
    (w_conv, b_conv, gamma, beta, rmean, rvar, fc1_w, fc1_b, fc2_w, fc2_b) = params
    conv = jax.lax.conv_general_dilated(
        x, w_conv, window_strides=(1,), padding=((1, 1),),
        dimension_numbers=("NCH", "OIH", "NCH")) + b_conv[None, :, None]
    bn = (conv - rmean[None, :, None]) / jnp.sqrt(rvar[None, :, None] + EPS)
    bn = bn * gamma[None, :, None] + beta[None, :, None]
    r = jnp.maximum(bn, 0.0)
    pooled = jnp.max(r.reshape(B, C_OUT, L2, 2), axis=-1)    # MaxPool1d(2)
    flat = pooled.reshape(B, FLAT)                           # channel-major flatten
    z1 = jnp.maximum(flat @ fc1_w.T + fc1_b, 0.0)
    z2 = z1 @ fc2_w.T + fc2_b
    return jax.nn.sigmoid(z2)


# ----------------------------- main -------------------------------------------
if __name__ == "__main__":
    key = jax.random.PRNGKey(0)
    ks = jax.random.split(key, 12)

    x = jax.random.normal(ks[0], (B, C_IN, L), dtype=jnp.float32)

    w_conv = 0.1 * jax.random.normal(ks[1], (C_OUT, C_IN, K), dtype=jnp.float32)
    b_conv = 0.1 * jax.random.normal(ks[2], (C_OUT,), dtype=jnp.float32)
    gamma = 1.0 + 0.1 * jax.random.normal(ks[3], (C_OUT,), dtype=jnp.float32)
    beta = 0.1 * jax.random.normal(ks[4], (C_OUT,), dtype=jnp.float32)
    rmean = 0.1 * jax.random.normal(ks[5], (C_OUT,), dtype=jnp.float32)
    rvar = 0.5 + jnp.abs(jax.random.normal(ks[6], (C_OUT,), dtype=jnp.float32))
    fc1_w = 0.1 * jax.random.normal(ks[7], (H1, FLAT), dtype=jnp.float32)
    fc1_b = 0.1 * jax.random.normal(ks[8], (H1,), dtype=jnp.float32)
    fc2_w = 0.1 * jax.random.normal(ks[9], (1, H1), dtype=jnp.float32)
    fc2_b = 0.1 * jax.random.normal(ks[10], (1,), dtype=jnp.float32)

    params = (w_conv, b_conv, gamma, beta, rmean, rvar, fc1_w, fc1_b, fc2_w, fc2_b)
    prepped = prepare_params(params)          # parameter-only folding, done once

    out = cnn_forward(x, prepped)
    out = jax.block_until_ready(out)

    ref = reference_forward(x, params)
    np.testing.assert_allclose(np.asarray(out), np.asarray(ref), rtol=1e-5, atol=1e-5)

    assert out.shape == (B, 1)
    print("KERNEL_OK")
</pallas_src>

<mosaic_0001>
module attributes {stable_mosaic.version = 11 : i64} {
  func.func @fused_forward_kernel(%arg0: memref<2x64xf32, #tpu.memory_space<vmem>>, %arg1: memref<192x256xf32, #tpu.memory_space<vmem>>, %arg2: memref<4x256xf32, #tpu.memory_space<vmem>>, %arg3: memref<2x1xf32, #tpu.memory_space<vmem>>) attributes {dimension_semantics = [], scalar_prefetch = 0 : i64, scratch_operands = 0 : i64, tpu.core_type = #tpu.core_type<tc>} {
    %c0 = arith.constant 0 : index
    %c0_0 = arith.constant 0 : index
    %0 = vector.load %arg0[%c0, %c0_0] : memref<2x64xf32, #tpu.memory_space<vmem>>, vector<2x64xf32>
    %c0_1 = arith.constant 0 : index
    %c0_2 = arith.constant 0 : index
    %1 = vector.load %arg1[%c0_1, %c0_2] : memref<192x256xf32, #tpu.memory_space<vmem>>, vector<64x256xf32>
    %c64 = arith.constant 64 : index
    %c0_3 = arith.constant 0 : index
    %2 = vector.load %arg1[%c64, %c0_3] : memref<192x256xf32, #tpu.memory_space<vmem>>, vector<128x32xf32>
    %c0_4 = arith.constant 0 : index
    %c0_5 = arith.constant 0 : index
    %3 = vector.load %arg2[%c0_4, %c0_5] : memref<4x256xf32, #tpu.memory_space<vmem>>, vector<1x256xf32>
    %c1 = arith.constant 1 : index
    %c0_6 = arith.constant 0 : index
    %4 = vector.load %arg2[%c1, %c0_6] : memref<4x256xf32, #tpu.memory_space<vmem>>, vector<1x32xf32>
    %c2 = arith.constant 2 : index
    %c0_7 = arith.constant 0 : index
    %5 = vector.load %arg2[%c2, %c0_7] : memref<4x256xf32, #tpu.memory_space<vmem>>, vector<1x32xf32>
    %c3 = arith.constant 3 : index
    %c0_8 = arith.constant 0 : index
    %6 = vector.load %arg2[%c3, %c0_8] : memref<4x256xf32, #tpu.memory_space<vmem>>, vector<1x1xf32>
    %cst = arith.constant dense<0.000000e+00> : vector<2x256xf32>
    %7 = tpu.matmul %0, %1, %cst {dimension_numbers = #tpu.dot_dimension_numbers<[1], [0], [0], [1], [0, 0, 1, 1], [], []>} : vector<2x64xf32>, vector<64x256xf32>, vector<2x256xf32> -> vector<2x256xf32>
    %8 = vector.broadcast %3 : vector<1x256xf32> to vector<2x256xf32>
    %9 = arith.addf %7, %8 : vector<2x256xf32>
    %cst_9 = arith.constant 0.000000e+00 : f32
    %10 = vector.broadcast %cst_9 : f32 to vector<2x256xf32>
    %11 = arith.maximumf %9, %10 : vector<2x256xf32>
    %12 = vector.extract_strided_slice %11 {offsets = [0, 0], sizes = [2, 128], strides = [1, 1]} : vector<2x256xf32> to vector<2x128xf32>
    %13 = vector.extract_strided_slice %11 {offsets = [0, 128], sizes = [2, 128], strides = [1, 1]} : vector<2x256xf32> to vector<2x128xf32>
    %14 = arith.maximumf %12, %13 : vector<2x128xf32>
    %cst_10 = arith.constant dense<0.000000e+00> : vector<2x32xf32>
    %15 = tpu.matmul %14, %2, %cst_10 {dimension_numbers = #tpu.dot_dimension_numbers<[1], [0], [0], [1], [0, 0, 1, 1], [], []>} : vector<2x128xf32>, vector<128x32xf32>, vector<2x32xf32> -> vector<2x32xf32>
    %16 = vector.broadcast %4 : vector<1x32xf32> to vector<2x32xf32>
    %17 = arith.addf %15, %16 : vector<2x32xf32>
    %cst_11 = arith.constant 0.000000e+00 : f32
    %18 = vector.broadcast %cst_11 : f32 to vector<2x32xf32>
    %19 = arith.maximumf %17, %18 : vector<2x32xf32>
    %20 = vector.broadcast %5 : vector<1x32xf32> to vector<2x32xf32>
    %21 = arith.mulf %19, %20 : vector<2x32xf32>
    %cst_12 = arith.constant dense<0.000000e+00> : vector<2xf32>
    %22 = vector.multi_reduction <add>, %21, %cst_12 [1] : vector<2x32xf32> to vector<2xf32>
    %23 = vector.shape_cast %22 : vector<2xf32> to vector<2x1xf32>
    %24 = vector.broadcast %6 : vector<1x1xf32> to vector<2x1xf32>
    %25 = arith.addf %23, %24 : vector<2x1xf32>
    %cst_13 = arith.constant 0.000000e+00 : f32
    %26 = vector.broadcast %cst_13 : f32 to vector<2x1xf32>
    %27 = arith.subf %26, %25 : vector<2x1xf32>
    %28 = math.exp %27 : vector<2x1xf32>
    %cst_14 = arith.constant 1.000000e+00 : f32
    %29 = vector.broadcast %cst_14 : f32 to vector<2x1xf32>
    %30 = arith.addf %29, %28 : vector<2x1xf32>
    %cst_15 = arith.constant 1.000000e+00 : f32
    %31 = vector.broadcast %cst_15 : f32 to vector<2x1xf32>
    %32 = arith.divf %31, %30 : vector<2x1xf32>
    %c0_16 = arith.constant 0 : index
    %c0_17 = arith.constant 0 : index
    %33 = vector.load %arg3[%c0_16, %c0_17] : memref<2x1xf32, #tpu.memory_space<vmem>>, vector<2x1xf32>
    tpu.vector_store %arg3[%c0_16, %c0_17], %32 {strides = array<i32>} : memref<2x1xf32, #tpu.memory_space<vmem>>, vector<2x1xf32>,
    return
  }
}

</mosaic_0001>

<llo_original>
// kernel: cnn_forward.1
$region0: #{cnn_forward.1}
  #allocation0 [shape = 'u32[]', space=smem, size = 0x4, offset = 0x4, fixed_abs, tag = 'smem constant byte address 0x4 - core index']
  #allocation1 [shape = 'u32[72,128]{1,0:T(1,128)}', space=vmem, size = 0x9000, scoped, tag = 'internal scratch']
  %s0 = inlined_call_operand.vmem [shape: f32[2,64], index: 0, kind: input, shape index: {}]
  %s1 = inlined_call_operand.hbm [shape: f32[192,256], index: 1, kind: input, shape index: {}]
  %s2 = inlined_call_operand.vmem [shape: f32[4,256], index: 2, kind: input, shape index: {}]
  %s3 = inlined_call_operand.vmem [shape: f32[2,1], index: 3, kind: output, shape index: {}]
  %s4 = sld [smem:[#allocation0]]
  $region26: #{cnn_forward.1} parent=0
    _
  %s6 = ssub.s32 1, %s4
  %s7 = scalar_select 0, %s6, %s4
  $region1: #{cnn_forward.1} parent=0
    #allocation2 [shape = 'u8[196608]{0}', space=vmem, size = 0x30000, scoped, tag = 'input window, operand 1, single buffered']
    #allocation3 [shape = 's32[1]{0}', space=sflag, size = 0x4, scoped, tag = 'scoped memory for cnn_forward.1']
    %8 = vsyncpa [#allocation3], 0
    // Predicated region
    $region2: #{cnn_forward.1} parent=1 // pred_check
      _
    $region3: #{cnn_forward.1} parent=1 // pred_check_branch
      %10 = sbr.rel (0) target = $region5
    $region4: #{cnn_forward.1} parent=1 // pred_region
      _
    $region5: #{cnn_forward.1} parent=1 // pred_fallthru
      _
    // Predicated region
    $region6: #{cnn_forward.1} parent=1 // pred_check
      _
    $region7: #{cnn_forward.1} parent=1 // pred_check_branch
      %12 = sbr.rel (0) target = $region9
    $region8: #{cnn_forward.1} parent=1 // pred_region
      %14 = vsyncadd [#allocation3], 0
      %s15 = sshll.u32 %s1, 4
      %s16 = int_to_ptr.hbm [resolvable:$true] %s15
      %s17 = sshll.u32 [#allocation2], 4
      %s18 = int_to_ptr.vmem [resolvable:$true] %s17
      %23 = dma.hbm_to_vmem [thread:$0]  %s16, 6144, %s18, [#allocation3], 256, 256, 16
    $region9: #{cnn_forward.1} parent=1 // pred_fallthru
      _
    // Predicated region
    $region10: #{cnn_forward.1} parent=1 // pred_check
      _
    $region11: #{cnn_forward.1} parent=1 // pred_check_branch
      %25 = sbr.rel (0) target = $region13
    $region12: #{cnn_forward.1} parent=1 // pred_region
      _
    $region13: #{cnn_forward.1} parent=1 // pred_fallthru
      _
    // Predicated region
    $region14: #{cnn_forward.1} parent=1 // pred_check
      _
    $region15: #{cnn_forward.1} parent=1 // pred_check_branch
      %27 = sbr.rel (0) target = $region17
    $region16: #{cnn_forward.1} parent=1 // pred_region
      %29 = dma.done [#allocation3], 6144
    $region17: #{cnn_forward.1} parent=1 // pred_fallthru
      _
    %v30 = vld [vmem:[%s0] sm:$0x3]
    %v31 = vld [vmem:[#allocation2] sm:$0xff]
    %v32 = vld [vmem:[#allocation2 + $0x8] sm:$0xff]
    %v33 = vld [vmem:[#allocation2 + $0x10] sm:$0xff]
    %v34 = vld [vmem:[#allocation2 + $0x18] sm:$0xff]
    %v35 = vld [vmem:[#allocation2 + $0x20] sm:$0xff]
    %v36 = vld [vmem:[#allocation2 + $0x28] sm:$0xff]
    %v37 = vld [vmem:[#allocation2 + $0x30] sm:$0xff]
    %v38 = vld [vmem:[#allocation2 + $0x38] sm:$0xff]
    %v39 = vld [vmem:[#allocation2 + $0x40] sm:$0xff]
    %v40 = vld [vmem:[#allocation2 + $0x48] sm:$0xff]
    %v41 = vld [vmem:[#allocation2 + $0x50] sm:$0xff]
    %v42 = vld [vmem:[#allocation2 + $0x58] sm:$0xff]
    %v43 = vld [vmem:[#allocation2 + $0x60] sm:$0xff]
    %v44 = vld [vmem:[#allocation2 + $0x68] sm:$0xff]
    %v45 = vld [vmem:[#allocation2 + $0x70] sm:$0xff]
    %v46 = vld [vmem:[#allocation2 + $0x78] sm:$0xff]
    %v47 = vld [vmem:[#allocation2 + $0x80] sm:$0xff]
    %v48 = vld [vmem:[#allocation2 + $0x90] sm:$0xff]
    %v49 = vld [vmem:[#allocation2 + $0xa0] sm:$0xff]
    %v50 = vld [vmem:[#allocation2 + $0xb0] sm:$0xff]
    %v51 = vld [vmem:[#allocation2 + $0xc0] sm:$0xff]
    %v52 = vld [vmem:[#allocation2 + $0xd0] sm:$0xff]
    %v53 = vld [vmem:[#allocation2 + $0xe0] sm:$0xff]
    %v54 = vld [vmem:[#allocation2 + $0xf0] sm:$0xff]
    %v55 = vld [vmem:[#allocation2 + $0x100] sm:$0xff]
    %v56 = vld [vmem:[#allocation2 + $0x110] sm:$0xff]
    %v57 = vld [vmem:[#allocation2 + $0x120] sm:$0xff]
    %v58 = vld [vmem:[#allocation2 + $0x130] sm:$0xff]
    %v59 = vld [vmem:[#allocation2 + $0x140] sm:$0xff]
    %v60 = vld [vmem:[#allocation2 + $0x150] sm:$0xff]
    %v61 = vld [vmem:[#allocation2 + $0x160] sm:$0xff]
    %v62 = vld [vmem:[#allocation2 + $0x170] sm:$0xff]
    %v63 = vld [vmem:[%s2] ss:$4 sm:$0x3]
    %v64 = vld [vmem:[%s2 + $0x1] sm:$0x1]
    %v65 = vld [vmem:[%s2 + $0x2] sm:$0x1]
    %v66 = vld [vmem:[%s2 + $0x3] sm:$0x1]
    %v68 = vperm.slane %v63, 0
    %v69 = vperm.slane %v63, 1
    %vm72 = vcmask 523264
    %v74 = vsel %vm72, %v30, 0
    %76 = vmatpush.msra.mxu0 0.0
    %77 = vmatpush.msra.mxu0 0.0
    %78 = vmatpush.msra.mxu0 0.0
    %79 = vmatpush.msra.mxu0 0.0
    %80 = vmatpush.msra.mxu0 0.0
    %81 = vmatpush.msra.mxu0 0.0
    %82 = vmatpush.msra.mxu0 0.0
    %83 = vmatpush.msra.mxu0 0.0
    %84 = vmatpush.msra.mxu0 %v45
    %85 = vmatpush.msra.mxu0 %v43
    %86 = vmatpush.msra.mxu0 %v41
    %87 = vmatpush.msra.mxu0 %v39
    %88 = vmatpush.msra.mxu0 %v37
    %89 = vmatpush.msra.mxu0 %v35
    %90 = vmatpush.msra.mxu0 %v33
    %91 = vmatpush.msra.mxu0 %v31
    %92 = vmatmul.f32.gmra.mxu0 %v74
    %v93 = vpop.f32.mrf.mxu0
    %v94 = vadd.f32 %v68, %v93
    %95 = vdwg.mxu0
    %96 = vmatpush.msra.mxu0 0.0
    %97 = vmatpush.msra.mxu0 0.0
    %98 = vmatpush.msra.mxu0 0.0
    %99 = vmatpush.msra.mxu0 0.0
    %100 = vmatpush.msra.mxu0 0.0
    %101 = vmatpush.msra.mxu0 0.0
    %102 = vmatpush.msra.mxu0 0.0
    %103 = vmatpush.msra.mxu0 0.0
    %104 = vmatpush.msra.mxu0 %v46
    %105 = vmatpush.msra.mxu0 %v44
    %106 = vmatpush.msra.mxu0 %v42
    %107 = vmatpush.msra.mxu0 %v40
    %108 = vmatpush.msra.mxu0 %v38
    %109 = vmatpush.msra.mxu0 %v36
    %110 = vmatpush.msra.mxu0 %v34
    %111 = vmatpush.msra.mxu0 %v32
    %112 = vmatmul.f32.gmra.mxu0 %v74
    %v113 = vpop.f32.mrf.mxu0
    %v114 = vadd.f32 %v69, %v113
    %115 = vdwg.mxu0
    %v116 = vmax.f32 %v94, 0.0
    %v117 = vmax.f32 %v114, 0.0
    %v118 = vmax.f32 %v116, %v117
    %v119 = vperm.slane %v64, 0
    %120 = vmatpush.msra.mxu0 %v62
    %121 = vmatpush.msra.mxu0 %v61
    %122 = vmatpush.msra.mxu0 %v60
    %123 = vmatpush.msra.mxu0 %v59
    %124 = vmatpush.msra.mxu0 %v58
    %125 = vmatpush.msra.mxu0 %v57
    %126 = vmatpush.msra.mxu0 %v56
    %127 = vmatpush.msra.mxu0 %v55
    %128 = vmatpush.msra.mxu0 %v54
    %129 = vmatpush.msra.mxu0 %v53
    %130 = vmatpush.msra.mxu0 %v52
    %131 = vmatpush.msra.mxu0 %v51
    %132 = vmatpush.msra.mxu0 %v50
    %133 = vmatpush.msra.mxu0 %v49
    %134 = vmatpush.msra.mxu0 %v48
    %135 = vmatpush.msra.mxu0 %v47
    %136 = vmatmul.f32.gmra.mxu0 %v118
    %v137 = vpop.f32.mrf.mxu0
    %v138 = vadd.f32 %v119, %v137
    %139 = vdwg.mxu0
    %v140 = vmax.f32 %v138, 0.0
    %v141 = vperm.slane %v65, 0
    %v142 = vmul.f32 %v140, %v141
    %vm143 = vcmask 254976
    %v144 = vsel %vm143, %v142, 0.0
    %145 = vadd.xlane.f32.xlu0 %v144
    %v146 = vpop.xlane.xlu0 %145
    %v147 = vperm.slane %v66, 0
    %v148 = vadd.f32 %v146, %v147
    %v149 = vsub.f32 0.0, %v148
    %v150 = vmul.f32 %v149, 1.442695
    %v151 = vpow.pop %v150
    %v152 = vadd.f32 %v151, 1.0
    %v153 = vrcp.pop %v152
    %v154 = vmul.f32 %v152, %v153
    %v155 = vsub.f32 1.0, %v154
    %v156 = vmul.f32 %v153, %v155
    %v157 = vadd.f32 %v153, %v156
    %vm158 = vweird.f32 %v152
    %vm159 = vweird.f32 %v153
    %vm160 = vmor %vm158, %vm159
    %v161 = vsel %vm160, %v153, %v157
    %v162 = vand.u32 2147483647, %v152
    %vm163 = vcmp.eq.f32.partialorder %v162, 8.507059e+37
    %v164 = vand.u32 %v152, 2147483648
    %v165 = vor.u32 1.1754944e-38, %v164
    %v166 = vsel %vm163, %v165, %v161
    %v167 = vmul.f32 1.0, %v166
    %vm168 = vcmask 1024
    %169 = vst.msk [vmem:[%s3] sm:$0x3] %vm168, %v167
    // Predicated region
    $region18: #{cnn_forward.1} parent=1 // pred_check
      _
    $region19: #{cnn_forward.1} parent=1 // pred_check_branch
      %171 = sbr.rel (0) target = $region21
    $region20: #{cnn_forward.1} parent=1 // pred_region
      _
    $region21: #{cnn_forward.1} parent=1 // pred_fallthru
      _
    // Predicated region
    $region22: #{cnn_forward.1} parent=1 // pred_check
      _
    $region23: #{cnn_forward.1} parent=1 // pred_check_branch
      %173 = sbr.rel (0) target = $region25
    $region24: #{cnn_forward.1} parent=1 // pred_region
      _
    $region25: #{cnn_forward.1} parent=1 // pred_fallthru
      _
    %174 = vsyncpa [#allocation3], 1

</llo_original>
